<compile_context>
chip_gen: v5e
topology: v5e:2x2
jax: 0.10.0
libtpu: 0.0.40
codegen_flags: <defaults>
</compile_context>

<pallas_src>
import functools

import jax
import jax.numpy as jnp
from jax.experimental import pallas as pl
from jax.experimental.pallas import tpu as pltpu


def _tvloss_kernel(y_ref, yhat_ref, out_ref, *, nc, tb):
    """One grid step = one (tb, H, W) chunk of (H, W) slices.

    Writes one lane-dense (1, 8, 256) block of per-chunk partial sums:
      lanes [0,128)   : sum((yhat - y)^2)                       (MSE numerator)
      lanes [128,256) : sum_h |diff[:, h+1, :] - diff[:, h, :]| (TV numerator)
    where diff = yhat - y (note |d_y - d_yhat| == |d_(yhat - y)|).
    """
    y = y_ref[...].astype(jnp.float32)        # (tb, H, W)
    yhat = yhat_ref[...].astype(jnp.float32)  # (tb, H, W)
    diff = yhat - y

    if nc % tb != 0:
        # Ragged last block: slices past the logical end contain unspecified
        # padding -> zero them.  One cheap (tb,1,1) select covers both sums
        # (a fully-zeroed slice contributes 0 to sq, cyclic TV and wrap term).
        valid = nc - pl.program_id(0) * tb
        sl = jax.lax.broadcasted_iota(jnp.int32, (tb, 1, 1), 0)
        diff = jnp.where(sl < valid, diff, 0.0)

    sq = jnp.sum(diff * diff)

    # TV term via XLU sublane rotation (non-negative shift).  The sum over all
    # H cyclic adjacent pairs is direction-independent; subtract the single
    # wrap pair (rows 0 and H-1) to get the H-1 "real" adjacent differences.
    h = diff.shape[1]                       # == full H (block carries full H)
    shifted = pltpu.roll(diff, shift=1, axis=1)
    tv_cyc = jnp.sum(jnp.abs(shifted - diff))
    wrap = jnp.sum(jnp.abs(diff[:, 0, :] - diff[:, h - 1, :]))
    tv = tv_cyc - wrap

    out_ref[:, :, 0:128] = jnp.full((1, 8, 128), sq, jnp.float32)
    out_ref[:, :, 128:256] = jnp.full((1, 8, 128), tv, jnp.float32)


@functools.partial(jax.jit, static_argnames=("beta",))
def tv_loss(yhat, y, beta=0.01):
    assert yhat.shape == y.shape and yhat.dtype == y.dtype
    B, C, H, W = y.shape
    NC = B * C

    # Glue: collapse batch/channel; the TV diff is along H, so batching slices
    # along the leading axis does not change the math.
    y2 = y.reshape(NC, H, W)
    yhat2 = yhat.reshape(NC, H, W)

    # ---- tile sizing (dtype- and generation-aware) ---------------------------
    itemsize = jnp.dtype(y.dtype).itemsize
    sub_h = -(-H // 8) * 8                   # (8, 128) layout padding
    lane_w = -(-W // 128) * 128
    native_slice = sub_h * lane_w * itemsize  # one (H, W) slice, native dtype
    f32_slice = sub_h * lane_w * 4            # one (H, W) slice, f32
    # 2 inputs x 2 pipeline buffers (native dtype) + ~3 f32 live intermediates.
    per_slice = 4 * native_slice + 3 * f32_slice

    kind = jax.devices()[0].device_kind.lower()
    if "v7" in kind:
        budget, vmem_limit = 32 << 20, 48 << 20    # 64 MiB physical VMEM / TC
    else:
        budget, vmem_limit = 48 << 20, 80 << 20    # v5e/v6e: 128 MiB physical

    tb_max = max(1, budget // per_slice)
    g_min = 2 if NC >= 2 else 1       # keep both v7x TCs fed; ~free elsewhere
    g = max(g_min, pl.cdiv(NC, tb_max))
    tb = pl.cdiv(NC, g)               # balanced blocks; last one may be short
    g = pl.cdiv(NC, tb)               # ragged last block is masked in-kernel

    cost = pl.CostEstimate(
        flops=6 * NC * H * W,
        transcendentals=0,
        bytes_accessed=2 * NC * H * W * itemsize + g * 8 * 256 * 4,
    )

    parts = pl.pallas_call(
        functools.partial(_tvloss_kernel, nc=NC, tb=tb),
        out_shape=jax.ShapeDtypeStruct((g, 8, 256), jnp.float32),
        grid=(g,),
        in_specs=[
            # Blocks carry the FULL (H, W) extent (required for the block-local
            # TV pairing along H).
            pl.BlockSpec((tb, H, W), lambda i: (i, 0, 0)),
            pl.BlockSpec((tb, H, W), lambda i: (i, 0, 0)),
        ],
        out_specs=pl.BlockSpec((1, 8, 256), lambda i: (i, 0, 0)),
        compiler_params=pltpu.CompilerParams(
            dimension_semantics=("parallel",),   # independent per-chunk partials
            vmem_limit_bytes=vmem_limit,
        ),
        cost_estimate=cost,
    )(y2, yhat2)

    sq_sum = jnp.sum(parts[:, 0, 0])
    tv_sum = jnp.sum(parts[:, 0, 128])

    mse = sq_sum / jnp.float32(B * C * H * W)
    E = tv_sum / jnp.float32(H) / jnp.float32(B)
    return mse + jnp.float32(beta) * E


def _tv_loss_ref(yhat, y, beta=0.01):
    """Pure-JAX reference mirroring the PyTorch forward (MSE branch)."""
    B, C, H, W = y.shape
    yhat = yhat.astype(jnp.float32)
    y = y.astype(jnp.float32)
    dy = y[:, :, 1:, :] - y[:, :, :-1, :]
    dyhat = yhat[:, :, 1:, :] - yhat[:, :, :-1, :]
    E = jnp.sum(jnp.abs(dy - dyhat)) / H / B
    mse = jnp.mean((yhat - y) ** 2)
    return mse + beta * E


if __name__ == "__main__":
    key = jax.random.PRNGKey(0)
    k1, k2, k3, k4 = jax.random.split(key, 4)

    # Primary smoke shape.
    B, C, H, W = 2, 4, 16, 16
    y = jax.random.normal(k1, (B, C, H, W), dtype=jnp.float32)
    yhat = jax.random.normal(k2, (B, C, H, W), dtype=jnp.float32)
    out = jax.block_until_ready(tv_loss(yhat, y, beta=0.01))
    ref = _tv_loss_ref(yhat, y, beta=0.01)
    assert jnp.allclose(out, ref, rtol=1e-5, atol=1e-5), (out, ref)

    # Ragged leading axis (NC=3 -> tb=2, last block short) + unaligned W.
    B2, C2, H2, W2 = 3, 1, 16, 20
    yb = jax.random.normal(k3, (B2, C2, H2, W2), dtype=jnp.float32)
    yhb = jax.random.normal(k4, (B2, C2, H2, W2), dtype=jnp.float32)
    out2 = jax.block_until_ready(tv_loss(yhb, yb, beta=0.01))
    ref2 = _tv_loss_ref(yhb, yb, beta=0.01)
    assert jnp.allclose(out2, ref2, rtol=1e-5, atol=1e-5), (out2, ref2)

    print("KERNEL_OK")
</pallas_src>

<mosaic_0001>
module attributes {stable_mosaic.version = 11 : i64} {
  func.func @_tvloss_kernel(%arg0: i32, %arg1: memref<4x16x16xf32, #tpu.memory_space<vmem>>, %arg2: memref<4x16x16xf32, #tpu.memory_space<vmem>>, %arg3: memref<1x8x256xf32, #tpu.memory_space<vmem>>) attributes {dimension_semantics = [#tpu.dimension_semantics<parallel>], iteration_bounds = array<i64: 2>, scalar_prefetch = 0 : i64, scratch_operands = 0 : i64, tpu.core_type = #tpu.core_type<tc>, window_params = [{transform_indices = @transform_0, window_bounds = array<i64: 4, 16, 16>}, {transform_indices = @transform_1, window_bounds = array<i64: 4, 16, 16>}, {transform_indices = @transform_2, window_bounds = array<i64: 1, 8, 256>}]} {
    %c0 = arith.constant 0 : index
    %c0_0 = arith.constant 0 : index
    %c0_1 = arith.constant 0 : index
    %0 = vector.load %arg1[%c0, %c0_0, %c0_1] : memref<4x16x16xf32, #tpu.memory_space<vmem>>, vector<4x16x16xf32>
    %c0_2 = arith.constant 0 : index
    %c0_3 = arith.constant 0 : index
    %c0_4 = arith.constant 0 : index
    %1 = vector.load %arg2[%c0_2, %c0_3, %c0_4] : memref<4x16x16xf32, #tpu.memory_space<vmem>>, vector<4x16x16xf32>
    %2 = arith.subf %1, %0 : vector<4x16x16xf32>
    %3 = arith.mulf %2, %2 : vector<4x16x16xf32>
    %4 = vector.shape_cast %3 : vector<4x16x16xf32> to vector<1x4x16x16xf32>
    %cst = arith.constant dense<0.000000e+00> : vector<1xf32>
    %5 = vector.multi_reduction <add>, %4, %cst [1, 2, 3] : vector<1x4x16x16xf32> to vector<1xf32>
    %6 = vector.shape_cast %5 : vector<1xf32> to vector<1x1x1x1xf32>
    %7 = vector.extract %6[0, 0, 0, 0] : f32 from vector<1x1x1x1xf32>
    %c1_i32 = arith.constant 1 : i32
    %8 = tpu.dynamic_rotate %2 by %c1_i32 dim 1 : vector<4x16x16xf32>, i32 -> vector<4x16x16xf32>
    %9 = arith.subf %8, %2 : vector<4x16x16xf32>
    %10 = math.absf %9 : vector<4x16x16xf32>
    %11 = vector.shape_cast %10 : vector<4x16x16xf32> to vector<1x4x16x16xf32>
    %cst_5 = arith.constant dense<0.000000e+00> : vector<1xf32>
    %12 = vector.multi_reduction <add>, %11, %cst_5 [1, 2, 3] : vector<1x4x16x16xf32> to vector<1xf32>
    %13 = vector.shape_cast %12 : vector<1xf32> to vector<1x1x1x1xf32>
    %14 = vector.extract %13[0, 0, 0, 0] : f32 from vector<1x1x1x1xf32>
    %15 = vector.extract_strided_slice %2 {offsets = [0, 0, 0], sizes = [4, 1, 16], strides = [1, 1, 1]} : vector<4x16x16xf32> to vector<4x1x16xf32>
    %16 = vector.shape_cast %15 : vector<4x1x16xf32> to vector<4x16xf32>
    %17 = vector.extract_strided_slice %2 {offsets = [0, 15, 0], sizes = [4, 1, 16], strides = [1, 1, 1]} : vector<4x16x16xf32> to vector<4x1x16xf32>
    %18 = vector.shape_cast %17 : vector<4x1x16xf32> to vector<4x16xf32>
    %19 = arith.subf %16, %18 : vector<4x16xf32>
    %20 = math.absf %19 : vector<4x16xf32>
    %21 = vector.shape_cast %20 : vector<4x16xf32> to vector<1x4x16xf32>
    %cst_6 = arith.constant dense<0.000000e+00> : vector<1xf32>
    %22 = vector.multi_reduction <add>, %21, %cst_6 [1, 2] : vector<1x4x16xf32> to vector<1xf32>
    %23 = vector.shape_cast %22 : vector<1xf32> to vector<1x1x1xf32>
    %24 = vector.extract %23[0, 0, 0] : f32 from vector<1x1x1xf32>
    %25 = arith.subf %14, %24 : f32
    %26 = vector.broadcast %7 : f32 to vector<1x8x128xf32>
    %c0_7 = arith.constant 0 : index
    %c0_8 = arith.constant 0 : index
    %c0_9 = arith.constant 0 : index
    %27 = vector.load %arg3[%c0_7, %c0_8, %c0_9] : memref<1x8x256xf32, #tpu.memory_space<vmem>>, vector<1x8x128xf32>
    tpu.vector_store %arg3[%c0_7, %c0_8, %c0_9], %26 {strides = array<i32>} : memref<1x8x256xf32, #tpu.memory_space<vmem>>, vector<1x8x128xf32>,
    %28 = vector.broadcast %25 : f32 to vector<1x8x128xf32>
    %c0_10 = arith.constant 0 : index
    %c0_11 = arith.constant 0 : index
    %c128 = arith.constant 128 : index
    %29 = vector.load %arg3[%c0_10, %c0_11, %c128] : memref<1x8x256xf32, #tpu.memory_space<vmem>>, vector<1x8x128xf32>
    tpu.vector_store %arg3[%c0_10, %c0_11, %c128], %28 {strides = array<i32>} : memref<1x8x256xf32, #tpu.memory_space<vmem>>, vector<1x8x128xf32>,
    return
  }
  func.func @transform_0(%arg0: i32) -> (i32, i32, i32) {
    %c0_i32 = arith.constant 0 : i32
    %c0_i32_0 = arith.constant 0 : i32
    %c0_i32_1 = arith.constant 0 : i32
    return %arg0, %c0_i32, %c0_i32_0 : i32, i32, i32
  }
  func.func @transform_1(%arg0: i32) -> (i32, i32, i32) {
    %c0_i32 = arith.constant 0 : i32
    %c0_i32_0 = arith.constant 0 : i32
    %c0_i32_1 = arith.constant 0 : i32
    return %arg0, %c0_i32, %c0_i32_0 : i32, i32, i32
  }
  func.func @transform_2(%arg0: i32) -> (i32, i32, i32) {
    %c0_i32 = arith.constant 0 : i32
    %c0_i32_0 = arith.constant 0 : i32
    %c0_i32_1 = arith.constant 0 : i32
    return %arg0, %c0_i32, %c0_i32_0 : i32, i32, i32
  }
}

</mosaic_0001>

<llo_original>
// kernel: tv_loss.1
$region0: #{tv_loss.1}
  #allocation0 [shape = 'u32[]', space=smem, size = 0x4, offset = 0x4, fixed_abs, tag = 'smem constant byte address 0x4 - core index']
  #allocation1 [shape = 'u32[72,128]{1,0:T(1,128)}', space=vmem, size = 0x9000, scoped, tag = 'internal scratch']
  %s0 = inlined_call_operand.hbm [shape: f32[8,16,16], index: 0, kind: input, shape index: {}]
  %s1 = inlined_call_operand.hbm [shape: f32[8,16,16], index: 1, kind: input, shape index: {}]
  %s2 = inlined_call_operand.vmem [shape: f32[2,8,256], index: 2, kind: output, shape index: {}]
  %s3 = sld [smem:[#allocation0]]
  $region49: #{tv_loss.1} parent=0
    _
  %s5 = ssub.s32 1, %s3
  %s6 = scalar_select 0, %s5, %s3
  $region1: #{tv_loss.1} parent=0
    #allocation2 [shape = 'u8[65536]{0}', space=vmem, size = 0x10000, scoped, tag = 'input window, operand 0']
    #allocation3 [shape = 's32[2]{0}', space=sflag, size = 0x8, scoped, tag = 'scoped memory for tv_loss.1']
    #allocation4 [shape = 'u8[65536]{0}', space=vmem, size = 0x10000, scoped, tag = 'input window, operand 1']
    #allocation5 [shape = 's32[2]{0}', space=sflag, size = 0x8, scoped, tag = 'scoped memory for tv_loss.1']
    %7 = vsyncpa [#allocation3], 0
    %s8 = scalar_lea.sflag [#allocation3], 1
    %9 = vsyncpa %s8, 0
    %10 = vsyncpa [#allocation5], 0
    %s11 = scalar_lea.sflag [#allocation5], 1
    %12 = vsyncpa %s11, 0
    loop: start=0, step=1, limit=4
    $region2: #{tv_loss.1} parent=1 // loop_pre_header
      _
    $region3: #{tv_loss.1} parent=1 // loop_header
      %s14 = sphi 0, %s18
      %p15 = scmp.ge.s32.totalorder %s14, 4
      %s24 = sphi 0, %s26
      %s27 = sphi 0, %s24
      %s28 = sphi 0, %s27
      %s44 = sphi 0, %s28
      %s50 = sphi 0, %s52
      %s53 = sphi 0, %s50
      %s54 = sphi 0, %s53
      %s70 = sphi 0, %s54
      %s76 = sphi 0, %s78
      %s79 = sphi 0, %s76
      %s80 = sphi 0, %s79
      %s96 = sphi 0, %s80
    $region4: #{tv_loss.1} parent=1 // loop_header_branch
      %17 = sbr.rel (%p15) target = $region8
    $region5: #{tv_loss.1} parent=1 // loop_body
      %s19 = ssub.s32 %s14, 1
      %s20 = ssub.s32 %s14, 2
      %s21 = sadd.s32 %s14, 1
      %s22 = ssub.s32 %s14, %s21
      %p23 = scmp.eq.s32.totalorder %s22, 0
      %s25 = sadd.s32 %s24, 1
      %s26 = scalar_select %p23, %s24, %s25
      %p29 = pneg %p23
      %p30 = scmp.eq.s32.totalorder %s14, 1
      %p31 = por %p29, %p30
      %p32 = scmp.ne.s32.totalorder %s24, %s27
      %p33 = scmp.eq.s32.totalorder %s14, 0
      %p34 = por %p32, %p33
      %p35 = scmp.ne.s32.totalorder %s24, %s27
      %p36 = scmp.eq.s32.totalorder %s19, 1
      %p37 = por %p35, %p36
      %p38 = scmp.ne.s32.totalorder %s27, %s28
      %p39 = scmp.eq.s32.totalorder %s19, 0
      %p40 = por %p38, %p39
      %p41 = scmp.ne.s32.totalorder %s27, %s28
      %p42 = scmp.eq.s32.totalorder %s20, 1
      %p43 = por %p41, %p42
      %p45 = scmp.ne.s32.totalorder %s28, %s44
      %p46 = scmp.eq.s32.totalorder %s20, 0
      %p47 = por %p45, %p46
      %s48 = ssub.s32 %s14, %s21
      %p49 = scmp.eq.s32.totalorder %s48, 0
      %s51 = sadd.s32 %s50, 1
      %s52 = scalar_select %p49, %s50, %s51
      %p55 = pneg %p49
      %p56 = scmp.eq.s32.totalorder %s14, 1
      %p57 = por %p55, %p56
      %p58 = scmp.ne.s32.totalorder %s50, %s53
      %p59 = scmp.eq.s32.totalorder %s14, 0
      %p60 = por %p58, %p59
      %p61 = scmp.ne.s32.totalorder %s50, %s53
      %p62 = scmp.eq.s32.totalorder %s19, 1
      %p63 = por %p61, %p62
      %p64 = scmp.ne.s32.totalorder %s53, %s54
      %p65 = scmp.eq.s32.totalorder %s19, 0
      %p66 = por %p64, %p65
      %p67 = scmp.ne.s32.totalorder %s53, %s54
      %p68 = scmp.eq.s32.totalorder %s20, 1
      %p69 = por %p67, %p68
      %p71 = scmp.ne.s32.totalorder %s54, %s70
      %p72 = scmp.eq.s32.totalorder %s20, 0
      %p73 = por %p71, %p72
      %s74 = ssub.s32 %s14, %s21
      %p75 = scmp.eq.s32.totalorder %s74, 0
      %s77 = sadd.s32 %s76, 1
      %s78 = scalar_select %p75, %s76, %s77
      %p81 = pneg %p75
      %p82 = scmp.eq.s32.totalorder %s14, 1
      %p83 = por %p81, %p82
      %p84 = scmp.ne.s32.totalorder %s76, %s79
      %p85 = scmp.eq.s32.totalorder %s14, 0
      %p86 = por %p84, %p85
      %p87 = scmp.ne.s32.totalorder %s76, %s79
      %p88 = scmp.eq.s32.totalorder %s19, 1
      %p89 = por %p87, %p88
      %p90 = scmp.ne.s32.totalorder %s79, %s80
      %p91 = scmp.eq.s32.totalorder %s19, 0
      %p92 = por %p90, %p91
      %p93 = scmp.ne.s32.totalorder %s79, %s80
      %p94 = scmp.eq.s32.totalorder %s20, 1
      %p95 = por %p93, %p94
      %p97 = scmp.ne.s32.totalorder %s80, %s96
      %p98 = scmp.eq.s32.totalorder %s20, 0
      %p99 = por %p97, %p98
      %p100 = scmp.le.s32.totalorder 1, %s14
      %p101 = scmp.lt.s32.totalorder %s14, 3
      %p102 = pnand %p100, %p101
      %p103 = pneg %p102
      // Predicated region
      $region9: #{tv_loss.1} parent=5 // pred_check
        _
      $region10: #{tv_loss.1} parent=5 // pred_check_branch
        %105 = sbr.rel (%p102) target = $region12
      $region11: #{tv_loss.1} parent=5 // pred_region
        %s106 = ssub.s32 %s14, 1
      $region12: #{tv_loss.1} parent=5 // pred_fallthru
        _
      %p107 = scmp.lt.s32.totalorder %s14, 2
      // Predicated region
      $region13: #{tv_loss.1} parent=5 // pred_check
        %p108 = pneg %p107
      $region14: #{tv_loss.1} parent=5 // pred_check_branch
        %110 = sbr.rel (%p108) target = $region16
      $region15: #{tv_loss.1} parent=5 // pred_region
        // Predicated region
        $region17: #{tv_loss.1} parent=15 // pred_check
          %p111 = pneg %p34
        $region18: #{tv_loss.1} parent=15 // pred_check_branch
          %113 = sbr.rel (%p111) target = $region20
        $region19: #{tv_loss.1} parent=15 // pred_region
          %s114 = sand.u32 %s24, 1
          %s115 = scalar_lea.sflag [#allocation3], %s114
          %s116 = sand.u32 %s24, 1
          %s117 = smul.addr %s116, 64
          %s118 = scalar_lea.vmem [#allocation2], %s117
          %s119 = smul.u32 4, %s14
          %121 = vsyncadd %s115, 0
          %s122 = smul.addr %s119, 2
          %s123 = smul.addr %s122, 8
          %s124 = scalar_lea.hbm %s0, %s123
          %s125 = sshll.u32 %s124, 4
          %s126 = int_to_ptr.hbm [resolvable:$true] %s125
          %s127 = sshll.u32 %s118, 4
          %s128 = int_to_ptr.vmem [resolvable:$true] %s127
          %133 = dma.hbm_to_vmem [thread:$0]  %s126, 1024, %s128, %s115, 128, 128, 8
        $region20: #{tv_loss.1} parent=15 // pred_fallthru
          _
        // Predicated region
        $region21: #{tv_loss.1} parent=15 // pred_check
          %p134 = pneg %p60
        $region22: #{tv_loss.1} parent=15 // pred_check_branch
          %136 = sbr.rel (%p134) target = $region24
        $region23: #{tv_loss.1} parent=15 // pred_region
          %s137 = sand.u32 %s50, 1
          %s138 = scalar_lea.sflag [#allocation5], %s137
          %s139 = sand.u32 %s50, 1
          %s140 = smul.addr %s139, 64
          %s141 = scalar_lea.vmem [#allocation4], %s140
          %s142 = smul.u32 4, %s14
          %144 = vsyncadd %s138, 0
          %s145 = smul.addr %s142, 2
          %s146 = smul.addr %s145, 8
          %s147 = scalar_lea.hbm %s1, %s146
          %s148 = sshll.u32 %s147, 4
          %s149 = int_to_ptr.hbm [resolvable:$true] %s148
          %s150 = sshll.u32 %s141, 4
          %s151 = int_to_ptr.vmem [resolvable:$true] %s150
          %156 = dma.hbm_to_vmem [thread:$0]  %s149, 1024, %s151, %s138, 128, 128, 8
        $region24: #{tv_loss.1} parent=15 // pred_fallthru
          _
      $region16: #{tv_loss.1} parent=5 // pred_fallthru
        _
      %p157 = scmp.le.s32.totalorder 1, %s14
      %p158 = scmp.lt.s32.totalorder %s14, 3
      %p159 = pnand %p157, %p158
      %p160 = pneg %p159
      // Predicated region
      $region25: #{tv_loss.1} parent=5 // pred_check
        _
      $region26: #{tv_loss.1} parent=5 // pred_check_branch
        %162 = sbr.rel (%p159) target = $region28
      $region27: #{tv_loss.1} parent=5 // pred_region
        %s163 = ssub.s32 %s14, 1
        %s164 = sand.u32 %s27, 1
        %s165 = scalar_lea.sflag [#allocation3], %s164
        %s166 = sand.u32 %s27, 1
        %s167 = smul.addr %s166, 64
        %s168 = scalar_lea.vmem [#allocation2], %s167
        // Predicated region
        $region29: #{tv_loss.1} parent=27 // pred_check
          %p169 = pneg %p40
        $region30: #{tv_loss.1} parent=27 // pred_check_branch
          %171 = sbr.rel (%p169) target = $region32
        $region31: #{tv_loss.1} parent=27 // pred_region
          %173 = dma.done %s165, 1024
        $region32: #{tv_loss.1} parent=27 // pred_fallthru
          _
        %s174 = sand.u32 %s53, 1
        %s175 = scalar_lea.sflag [#allocation5], %s174
        %s176 = sand.u32 %s53, 1
        %s177 = smul.addr %s176, 64
        %s178 = scalar_lea.vmem [#allocation4], %s177
        // Predicated region
        $region33: #{tv_loss.1} parent=27 // pred_check
          %p179 = pneg %p66
        $region34: #{tv_loss.1} parent=27 // pred_check_branch
          %181 = sbr.rel (%p179) target = $region36
        $region35: #{tv_loss.1} parent=27 // pred_region
          %183 = dma.done %s175, 1024
        $region36: #{tv_loss.1} parent=27 // pred_fallthru
          _
        %s184 = sand.u32 %s27, 1
        %s185 = scalar_lea.sflag [#allocation3], %s184
        %s186 = sand.u32 %s27, 1
        %s187 = smul.addr %s186, 64
        %s188 = scalar_lea.vmem [#allocation2], %s187
        %p189 = pneg %p40
        %p190 = pneg %p37
        %s191 = sand.u32 %s53, 1
        %s192 = scalar_lea.sflag [#allocation5], %s191
        %s193 = sand.u32 %s53, 1
        %s194 = smul.addr %s193, 64
        %s195 = scalar_lea.vmem [#allocation4], %s194
        %p196 = pneg %p66
        %p197 = pneg %p63
        %p198 = pneg %p92
        %p199 = pneg %p89
        %p200 = scmp.lt.s32.totalorder %s19, 1
        %s201 = scalar_select %p200, %s19, 1
        %s202 = smul.addr %s201, 2
        %s203 = smul.addr %s202, 8
        %s204 = scalar_lea.vmem %s2, %s203
        %s205 = smul.u32 4, %s19
        %s206 = smul.u32 4, %s19
        %p207 = scmp.lt.s32.totalorder %s19, 1
        %s208 = scalar_select %p207, %s19, 1
        %s209 = smul.addr %s208, 2
        %s210 = smul.addr %s209, 8
        %s211 = scalar_lea.vmem %s2, %s210
        %v212 = vld [vmem:[%s168] sm:$0xff]
        %v213 = vld [vmem:[%s168 + $0x8] sm:$0xff]
        %v214 = vld [vmem:[%s168 + $0x10] sm:$0xff]
        %v215 = vld [vmem:[%s168 + $0x18] sm:$0xff]
        %v216 = vld [vmem:[%s168 + $0x20] sm:$0xff]
        %v217 = vld [vmem:[%s168 + $0x28] sm:$0xff]
        %v218 = vld [vmem:[%s168 + $0x30] sm:$0xff]
        %v219 = vld [vmem:[%s168 + $0x38] sm:$0xff]
        %v220 = vld [vmem:[%s178] sm:$0xff]
        %v221 = vld [vmem:[%s178 + $0x8] sm:$0xff]
        %v222 = vld [vmem:[%s178 + $0x10] sm:$0xff]
        %v223 = vld [vmem:[%s178 + $0x18] sm:$0xff]
        %v224 = vld [vmem:[%s178 + $0x20] sm:$0xff]
        %v225 = vld [vmem:[%s178 + $0x28] sm:$0xff]
        %v226 = vld [vmem:[%s178 + $0x30] sm:$0xff]
        %v227 = vld [vmem:[%s178 + $0x38] sm:$0xff]
        %v228 = vsub.f32 %v220, %v212
        %v229 = vsub.f32 %v221, %v213
        %v230 = vsub.f32 %v222, %v214
        %v231 = vsub.f32 %v223, %v215
        %v232 = vsub.f32 %v224, %v216
        %v233 = vsub.f32 %v225, %v217
        %v234 = vsub.f32 %v226, %v218
        %v235 = vsub.f32 %v227, %v219
        %v236 = vmul.f32 %v228, %v228
        %v237 = vmul.f32 %v229, %v229
        %v238 = vmul.f32 %v230, %v230
        %v239 = vmul.f32 %v231, %v231
        %v240 = vmul.f32 %v232, %v232
        %v241 = vmul.f32 %v233, %v233
        %v242 = vmul.f32 %v234, %v234
        %v243 = vmul.f32 %v235, %v235
        %vm244 = vcmask 130048
        %v245 = vsel %vm244, %v236, 0.0
        %v246 = vsel %vm244, %v237, 0.0
        %v247 = vadd.f32 %v245, %v246
        %v248 = vsel %vm244, %v238, 0.0
        %v249 = vadd.f32 %v247, %v248
        %v250 = vsel %vm244, %v239, 0.0
        %v251 = vadd.f32 %v249, %v250
        %v252 = vsel %vm244, %v240, 0.0
        %v253 = vadd.f32 %v251, %v252
        %v254 = vsel %vm244, %v241, 0.0
        %v255 = vadd.f32 %v253, %v254
        %v256 = vsel %vm244, %v242, 0.0
        %v257 = vadd.f32 %v255, %v256
        %v258 = vsel %vm244, %v243, 0.0
        %v259 = vadd.f32 %v257, %v258
        %260 = vadd.xlane.f32.xlu0 %v259
        %v261 = vpop.xlane.xlu0 %260
        %v262 = vrot.slane %v261, 4
        %v263 = vadd.f32 %v261, %v262
        %v264 = vrot.slane %v263, 2
        %v265 = vadd.f32 %v263, %v264
        %v266 = vrot.slane %v265, 1
        %v267 = vadd.f32 %v265, %v266
        %s268 = vtos %v267
        %v269 = vrot.slane %v228, 7
        %v270 = vrot.slane %v230, 7
        %v271 = vrot.slane %v232, 7
        %v272 = vrot.slane %v234, 7
        %v273 = vrot.slane %v229, 7
        %v274 = vrot.slane %v231, 7
        %v275 = vrot.slane %v233, 7
        %v276 = vrot.slane %v235, 7
        %v277 = vlaneseq
        %v278 = vshrl.u32 %v277, 7
        %vm279 = vcmp.lt.s32.totalorder %v278, 1
        %v280 = vsel %vm279, %v269, %v273
        %v281 = vsel %vm279, %v270, %v274
        %v282 = vsel %vm279, %v271, %v275
        %v283 = vsel %vm279, %v272, %v276
        %v284 = vsel %vm279, %v273, %v269
        %v285 = vsel %vm279, %v274, %v270
        %v286 = vsel %vm279, %v275, %v271
        %v287 = vsel %vm279, %v276, %v272
        %v288 = vsub.f32 %v284, %v228
        %v289 = vsub.f32 %v280, %v229
        %v290 = vsub.f32 %v285, %v230
        %v291 = vsub.f32 %v281, %v231
        %v292 = vsub.f32 %v286, %v232
        %v293 = vsub.f32 %v282, %v233
        %v294 = vsub.f32 %v287, %v234
        %v295 = vsub.f32 %v283, %v235
        %v296 = vand.u32 2147483647, %v288
        %v297 = vand.u32 2147483647, %v289
        %v298 = vand.u32 2147483647, %v290
        %v299 = vand.u32 2147483647, %v291
        %v300 = vand.u32 2147483647, %v292
        %v301 = vand.u32 2147483647, %v293
        %v302 = vand.u32 2147483647, %v294
        %v303 = vand.u32 2147483647, %v295
        %v304 = vsel %vm244, %v296, 0.0
        %v305 = vsel %vm244, %v297, 0.0
        %v306 = vadd.f32 %v304, %v305
        %v307 = vsel %vm244, %v298, 0.0
        %v308 = vadd.f32 %v306, %v307
        %v309 = vsel %vm244, %v299, 0.0
        %v310 = vadd.f32 %v308, %v309
        %v311 = vsel %vm244, %v300, 0.0
        %v312 = vadd.f32 %v310, %v311
        %v313 = vsel %vm244, %v301, 0.0
        %v314 = vadd.f32 %v312, %v313
        %v315 = vsel %vm244, %v302, 0.0
        %v316 = vadd.f32 %v314, %v315
        %v317 = vsel %vm244, %v303, 0.0
        %v318 = vadd.f32 %v316, %v317
        %319 = vadd.xlane.f32.xlu0 %v318
        %v320 = vpop.xlane.xlu0 %319
        %v321 = vrot.slane %v320, 4
        %v322 = vadd.f32 %v320, %v321
        %v323 = vrot.slane %v322, 2
        %v324 = vadd.f32 %v322, %v323
        %v325 = vrot.slane %v324, 1
        %v326 = vadd.f32 %v324, %v325
        %s327 = vtos %v326
        %v332 = vrot.slane %v229, 7
        %v333 = vrot.slane %v231, 7
        %v334 = vrot.slane %v233, 7
        %v335 = vrot.slane %v235, 7
        %v340 = vsub.f32 %v228, %v332
        %v341 = vsub.f32 %v230, %v333
        %v342 = vsub.f32 %v232, %v334
        %v343 = vsub.f32 %v234, %v335
        %v344 = vand.u32 2147483647, %v340
        %v345 = vand.u32 2147483647, %v341
        %v346 = vand.u32 2147483647, %v342
        %v347 = vand.u32 2147483647, %v343
        %v352 = vrot.slane %v345, 7
        %vm353 = vcmask 1041409
        %v354 = vsel %vm353, %v352, %v344
        %v355 = vrot.slane %v346, 6
        %vm356 = vcmask 1042434
        %v357 = vsel %vm356, %v355, %v354
        %v358 = vrot.slane %v347, 5
        %vm359 = vcmask 1043459
        %v360 = vsel %vm359, %v358, %v357
        %vm362 = vcmask 125952
        %v363 = vsel %vm362, %v360, 0.0
        %364 = vadd.xlane.f32.xlu0 %v363
        %v365 = vpop.xlane.xlu0 %364
        %v366 = vrot.slane %v365, 4
        %v367 = vadd.f32 %v365, %v366
        %v368 = vrot.slane %v367, 2
        %v369 = vadd.f32 %v367, %v368
        %v370 = vrot.slane %v369, 1
        %v371 = vadd.f32 %v369, %v370
        %s372 = vtos %v371
        %s373 = ssub.f32 %s327, %s372
        %v374 = vstv %s268
        %375 = vst [vmem:[%s211] sm:$0xff] %v374
        %v376 = vstv %s373
        %377 = vst [vmem:[%s211 + $0x8] sm:$0xff] %v376
        %p378 = scmp.lt.s32.totalorder %s19, 1
        %s379 = scalar_select %p378, %s19, 1
        %s380 = smul.addr %s379, 2
        %s381 = smul.addr %s380, 8
        %s382 = scalar_lea.vmem %s2, %s381
        // Predicated region
        $region37: #{tv_loss.1} parent=27 // pred_check
          %p383 = pneg %p89
        $region38: #{tv_loss.1} parent=27 // pred_check_branch
          %385 = sbr.rel (%p383) target = $region40
        $region39: #{tv_loss.1} parent=27 // pred_region
          _
        $region40: #{tv_loss.1} parent=27 // pred_fallthru
          _
      $region28: #{tv_loss.1} parent=5 // pred_fallthru
        _
      %p386 = scmp.le.s32.totalorder 2, %s14
      // Predicated region
      $region41: #{tv_loss.1} parent=5 // pred_check
        %p387 = pneg %p386
      $region42: #{tv_loss.1} parent=5 // pred_check_branch
        %389 = sbr.rel (%p387) target = $region44
      $region43: #{tv_loss.1} parent=5 // pred_region
        %s390 = ssub.s32 %s14, 2
        // Predicated region
        $region45: #{tv_loss.1} parent=43 // pred_check
          %p391 = pneg %p95
        $region46: #{tv_loss.1} parent=43 // pred_check_branch
          %393 = sbr.rel (%p391) target = $region48
        $region47: #{tv_loss.1} parent=43 // pred_region
          %p394 = scmp.lt.s32.totalorder %s20, 1
          %s395 = scalar_select %p394, %s20, 1
          %s396 = smul.addr %s395, 2
          %s397 = smul.addr %s396, 8
          %s398 = scalar_lea.vmem %s2, %s397
        $region48: #{tv_loss.1} parent=43 // pred_fallthru
          _
      $region44: #{tv_loss.1} parent=5 // pred_fallthru
        _
    $region6: #{tv_loss.1} parent=1 // loop_footer
      %s18 = sadd.s32 1, %s14
    $region7: #{tv_loss.1} parent=1 // loop_footer_branch
      %13 = sbr.rel target = $region3
    $region8: #{tv_loss.1} parent=1 // loop_exit
      _
    %399 = vsyncpa [#allocation3], 1
    %s400 = scalar_lea.sflag [#allocation3], 1
    %401 = vsyncpa %s400, 1
    %402 = vsyncpa [#allocation5], 1
    %s403 = scalar_lea.sflag [#allocation5], 1
    %404 = vsyncpa %s403, 1

</llo_original>
